<compile_context>
chip_gen: v7x
topology: tpu7x:2x2x1
jax: 0.10.0
libtpu: 0.0.40
codegen_flags: <defaults>
</compile_context>

<pallas_src>
import functools

import jax
import jax.numpy as jnp
from jax.experimental import pallas as pl
from jax.experimental.pallas import tpu as pltpu

_LANES = 128  # vreg lane width -> lane-dense, unmasked output stores
_MIB = 1024 * 1024


def _round_up(a, m):
    return ((a + m - 1) // m) * m


def _tpu_generation():
    """Best-effort TPU generation detection (5/6/7). None if unknown."""
    try:
        kind = jax.devices()[0].device_kind.lower().replace(" ", "")
    except Exception:
        return None
    if "v7" in kind or "tpu7" in kind:
        return 7
    if "v6" in kind or "tpu6" in kind:
        return 6
    if "v5" in kind or "tpu5" in kind:
        return 5
    return None


def _default_tile_bytes(gen):
    if gen == 7:
        return 8 * _MIB   # ~3.2 TB/s HBM: amortize the ~0.35 us/step overhead
    if gen == 6:
        return 4 * _MIB   # ~1.4 TB/s HBM: 4 MiB tiles keep overhead <~5%
    return 2 * _MIB       # v5e (16 MiB scoped VMEM default) / unknown chips


def _threshold_kernel(x_ref, o_ref, *, threshold, value):
    x = x_ref[...]
    o_ref[...] = jnp.where(x > threshold, x, jnp.asarray(value, dtype=x.dtype))


def my_threshold(x, threshold=0.0, value=0.0, *,
                 block_rows=None, donate_input=False):
    """Elementwise threshold: where(x > threshold, x, value). Matches MyThreshold.

    Set donate_input=True only if `x` is genuinely donated at the jit boundary
    (donate_argnums); otherwise aliasing forces XLA to insert a defensive copy.
    """
    orig_shape = x.shape
    orig_dtype = x.dtype
    n = x.size
    if n == 0:
        return x

    itemsize = jnp.dtype(orig_dtype).itemsize
    val_typed = jnp.asarray(value, dtype=orig_dtype)

    x_flat = jnp.ravel(x)  # free bitcast for contiguous row-major input

    # --- split off the (rare) <128-element unaligned tail -------------------
    n_aligned = (n // _LANES) * _LANES
    if n_aligned == 0:
        # Whole tensor smaller than one lane row: kernel overhead not worth it.
        return jnp.where(x > threshold, x, val_typed)

    if n_aligned == n:
        main, tail = x_flat, None          # common path: fully copy-free
    else:
        # TODO(synk): a fully copy-free unaligned path would need a masked-store
        # kernel on the raw HBM array (pl.ANY + manual DMA); prefix+tail split
        # is close enough for this rare case.
        main, tail = x_flat[:n_aligned], x_flat[n_aligned:]

    rows = n_aligned // _LANES
    x2d = main.reshape(rows, _LANES)

    # --- generation-aware tile selection ------------------------------------
    if block_rows is None:
        tile_bytes = _default_tile_bytes(_tpu_generation())
        block_rows = max(32, (tile_bytes // (_LANES * itemsize)) // 32 * 32)

    if rows > block_rows:
        br = block_rows
    elif rows >= 1024:
        # Mid-size input (>= ~512 KiB f32): guarantee >=2 grid steps so the
        # "parallel" grid axis can engage both TensorCores on v7x.
        br = min(rows, _round_up(pl.cdiv(rows, 2), 32))
    else:
        br = rows  # full-extent block: always a legal block shape

    grid = (pl.cdiv(rows, br),)  # ragged last block is masked by Pallas

    # --- VMEM budget: 2 arrays (in + out) x 2 pipeline buffers x tile --------
    tile_bytes_actual = br * _LANES * itemsize
    footprint = 4 * tile_bytes_actual
    vmem_limit = None
    if footprint + 16 * _MIB > 32 * _MIB:
        # Exceeds the v6e/v7x scoped default; make the limit explicit.
        # 48 MiB is safe on all generations (v7x physical VMEM = 64 MiB per TC).
        vmem_limit = min(footprint + 16 * _MIB, 48 * _MIB)

    kernel = functools.partial(_threshold_kernel, threshold=threshold, value=value)

    out2d = pl.pallas_call(
        kernel,
        out_shape=jax.ShapeDtypeStruct((rows, _LANES), orig_dtype),
        grid=grid,
        in_specs=[pl.BlockSpec((br, _LANES), lambda i: (i, 0))],
        out_specs=pl.BlockSpec((br, _LANES), lambda i: (i, 0)),
        compiler_params=pltpu.CompilerParams(
            dimension_semantics=("parallel",),   # shards grid across 2 TCs on v7x
            vmem_limit_bytes=vmem_limit,
        ),
        input_output_aliases=({0: 0} if donate_input else {}),
    )(x2d)

    out_flat = out2d.reshape(-1)
    if tail is not None:
        out_tail = jnp.where(tail > threshold, tail, val_typed)
        out_flat = jnp.concatenate([out_flat, out_tail])
    return out_flat.reshape(orig_shape)


if __name__ == "__main__":
    key = jax.random.PRNGKey(0)
    # NCHW input, small shape consistent with the module
    x = jax.random.normal(key, (2, 4, 16, 16), dtype=jnp.float32)

    # Default module parameters (threshold=0.0, value=0.0)
    out0 = jax.block_until_ready(my_threshold(x, threshold=0.0, value=0.0))
    ref0 = jnp.where(x > 0.0, x, jnp.float32(0.0))
    assert out0.shape == x.shape and out0.dtype == x.dtype
    assert jnp.array_equal(out0, ref0)

    # Non-default threshold/value
    thr, val = 0.5, -1.0
    out1 = jax.block_until_ready(my_threshold(x, threshold=thr, value=val))
    ref1 = jnp.where(x > thr, x, jnp.float32(val))
    assert jnp.array_equal(out1, ref1)

    # Unaligned (n % 128 != 0) tail path
    x2 = jax.random.normal(jax.random.PRNGKey(0), (1000,), dtype=jnp.float32)
    out2 = jax.block_until_ready(my_threshold(x2, threshold=0.1, value=-2.0))
    ref2 = jnp.where(x2 > 0.1, x2, jnp.float32(-2.0))
    assert out2.shape == x2.shape and jnp.array_equal(out2, ref2)

    print("KERNEL_OK")
</pallas_src>

<mosaic_0001>
module attributes {stable_mosaic.version = 11 : i64} {
  func.func @_threshold_kernel(%arg0: i32, %arg1: memref<16x128xf32, #tpu.memory_space<vmem>>, %arg2: memref<16x128xf32, #tpu.memory_space<vmem>>) attributes {dimension_semantics = [#tpu.dimension_semantics<parallel>], iteration_bounds = array<i64: 1>, scalar_prefetch = 0 : i64, scratch_operands = 0 : i64, tpu.core_type = #tpu.core_type<tc>, window_params = [{transform_indices = @transform_0, window_bounds = array<i64: 16, 128>}, {transform_indices = @transform_1, window_bounds = array<i64: 16, 128>}]} {
    %c0 = arith.constant 0 : index
    %c0_0 = arith.constant 0 : index
    %0 = vector.load %arg1[%c0, %c0_0] : memref<16x128xf32, #tpu.memory_space<vmem>>, vector<16x128xf32>
    %cst = arith.constant 0.000000e+00 : f32
    %1 = vector.broadcast %cst : f32 to vector<16x128xf32>
    %2 = arith.cmpf ogt, %0, %1 : vector<16x128xf32>
    %cst_1 = arith.constant 0.000000e+00 : f32
    %3 = vector.broadcast %cst_1 : f32 to vector<16x128xf32>
    %4 = arith.select %2, %0, %3 : vector<16x128xi1>, vector<16x128xf32>
    %c0_2 = arith.constant 0 : index
    %c0_3 = arith.constant 0 : index
    %5 = vector.load %arg2[%c0_2, %c0_3] : memref<16x128xf32, #tpu.memory_space<vmem>>, vector<16x128xf32>
    tpu.vector_store %arg2[%c0_2, %c0_3], %4 {strides = array<i32>} : memref<16x128xf32, #tpu.memory_space<vmem>>, vector<16x128xf32>,
    return
  }
  func.func @transform_0(%arg0: i32) -> (i32, i32) {
    %c0_i32 = arith.constant 0 : i32
    %c0_i32_0 = arith.constant 0 : i32
    return %arg0, %c0_i32 : i32, i32
  }
  func.func @transform_1(%arg0: i32) -> (i32, i32) {
    %c0_i32 = arith.constant 0 : i32
    %c0_i32_0 = arith.constant 0 : i32
    return %arg0, %c0_i32 : i32, i32
  }
}

</mosaic_0001>

<llo_original>
// kernel: tpu_custom_call.1
$region0: #{tpu_custom_call.1}
  #allocation0 [shape = 'u32[]', space=smem, size = 0x4, offset = 0x4, fixed_abs, tag = 'smem constant byte address 0x4 - core index']
  #allocation1 [shape = 'u32[144,128]{1,0:T(1,128)}', space=vmem, size = 0x12000, scoped, tag = 'internal scratch']
  %s0 = inlined_call_operand.hbm [shape: f32[16,128], index: 0, kind: input, shape index: {}]
  %s1 = inlined_call_operand.hbm [shape: f32[16,128], index: 1, kind: output, shape index: {}]
  %s2 = sld [smem:[#allocation0]]
  $region18: #{tpu_custom_call.1} parent=0
    _
  %s4 = ssub.s32 1, %s2
  %s5 = scalar_select 0, %s4, %s2
  $region1: #{tpu_custom_call.1} parent=0
    #allocation2 [shape = 'u8[8192]{0}', space=vmem, size = 0x2000, scoped, tag = 'input window, operand 0, single buffered']
    #allocation3 [shape = 's32[1]{0}', space=sflag, size = 0x4, scoped, tag = 'scoped memory for tpu_custom_call.1']
    #allocation4 [shape = 's32[1]{0}', space=sflag, size = 0x4, scoped, tag = 'scoped memory for tpu_custom_call.1']
    #allocation5 [shape = 'u8[8192]{0}', space=vmem, size = 0x2000, scoped, tag = 'output window, operand 0, single buffered']
    %6 = vsyncpa [#allocation3], 0
    %7 = vsyncpa [#allocation4], 0
    // Predicated region
    $region2: #{tpu_custom_call.1} parent=1 // pred_check
      _
    $region3: #{tpu_custom_call.1} parent=1 // pred_check_branch
      %9 = sbr.rel (0) target = $region5
    $region4: #{tpu_custom_call.1} parent=1 // pred_region
      %s11 = ssub.s32 256, 256
      %12 = vsyncadd [#allocation3], %s11
      %s13 = sshll.u32 [#allocation2], 4
      %s14 = int_to_ptr.vmem [resolvable:$true] %s13
      %19 = dma.hbm_to_vmem [thread:$0]  %s0, 256, %s14, [#allocation3], 128, 128, 8
    $region5: #{tpu_custom_call.1} parent=1 // pred_fallthru
      _
    // Predicated region
    $region6: #{tpu_custom_call.1} parent=1 // pred_check
      _
    $region7: #{tpu_custom_call.1} parent=1 // pred_check_branch
      %21 = sbr.rel (0) target = $region9
    $region8: #{tpu_custom_call.1} parent=1 // pred_region
      %22 = dma.done [#allocation3], 256
    $region9: #{tpu_custom_call.1} parent=1 // pred_fallthru
      _
    %v23 = vld [vmem:[#allocation2] sm:$0xff]
    %v24 = vld [vmem:[#allocation2 + $0x8] sm:$0xff]
    %vm25 = vcmp.gt.f32.partialorder %v23, 0.0
    %vm26 = vcmp.gt.f32.partialorder %v24, 0.0
    %v27 = vsel %vm25, %v23, 0.0
    %v28 = vsel %vm26, %v24, 0.0
    %29 = vst [vmem:[#allocation5] sm:$0xff] %v27
    %30 = vst [vmem:[#allocation5 + $0x8] sm:$0xff] %v28
    // Predicated region
    $region10: #{tpu_custom_call.1} parent=1 // pred_check
      _
    $region11: #{tpu_custom_call.1} parent=1 // pred_check_branch
      %32 = sbr.rel (0) target = $region13
    $region12: #{tpu_custom_call.1} parent=1 // pred_region
      %s34 = ssub.s32 256, 256
      %35 = vsyncadd [#allocation4], %s34
      %s36 = sshll.u32 [#allocation5], 4
      %s37 = int_to_ptr.vmem [resolvable:$true] %s36
      %42 = dma.vmem_to_hbm [thread:$0]  %s37, 256, %s1, [#allocation4], 128, 128, 8
    $region13: #{tpu_custom_call.1} parent=1 // pred_fallthru
      _
    // Predicated region
    $region14: #{tpu_custom_call.1} parent=1 // pred_check
      _
    $region15: #{tpu_custom_call.1} parent=1 // pred_check_branch
      %44 = sbr.rel (0) target = $region17
    $region16: #{tpu_custom_call.1} parent=1 // pred_region
      %45 = dma.done [#allocation4], 256
    $region17: #{tpu_custom_call.1} parent=1 // pred_fallthru
      _
    %46 = vsyncpa [#allocation3], 1
    %47 = vsyncpa [#allocation4], 1

</llo_original>
